<compile_context>
chip_gen: v7x
topology: tpu7x:2x2x1
jax: 0.10.0
libtpu: 0.0.40
codegen_flags: <defaults>
</compile_context>

<pallas_src>
import jax
import jax.numpy as jnp
from jax.experimental import pallas as pl
from jax.experimental.pallas import tpu as pltpu

LANES = 128
TARGET_TILE_BYTES = 4 * 1024 * 1024     # ~4 MiB per input tile
MIN_TILE_BYTES = 256 * 1024             # lower bound when splitting for megacore
VMEM_LIMIT_BYTES = 32 * 1024 * 1024     # 2*(in) + 2*(out) 4 MiB tiles = 16 MiB used


def _logistic_density_kernel(sc_ref, x_ref, o_ref):
    # sc_ref: SMEM scalars [0.5*s, 0.25*s]; x_ref/o_ref: VMEM tiles (tile_rows, 128).
    half_s = sc_ref[0]
    quarter_s = sc_ref[1]
    x = x_ref[...].astype(jnp.float32)
    t = jnp.tanh(half_s * x)                                      # single EUP op
    o_ref[...] = (quarter_s * (1.0 - t * t)).astype(o_ref.dtype)  # VPU elementwise


def _round_up(v, m):
    return -(-v // m) * m


def _choose_tile_rows(rows, itemsize, sublane):
    """Dtype-aware tile rows: ~4 MiB tiles, but keep >=~4 grid steps when cheap."""
    target = max(sublane, (TARGET_TILE_BYTES // (LANES * itemsize)) // sublane * sublane)
    min_rows = max(sublane, (MIN_TILE_BYTES // (LANES * itemsize)) // sublane * sublane)
    quarter = _round_up(_round_up(rows, 4) // 4, sublane)   # ceil(rows/4), sublane mult
    tile = min(target, max(min_rows, quarter))
    if tile >= rows:
        return rows   # single block; full-extent dims bypass the (8,128) rule
    return tile


def _run_2d(x2d, scalars, tile_rows):
    rows = x2d.shape[0]
    return pl.pallas_call(
        _logistic_density_kernel,
        out_shape=jax.ShapeDtypeStruct(x2d.shape, x2d.dtype),
        grid=(pl.cdiv(rows, tile_rows),),        # boundary block masked if non-divisible
        in_specs=[
            pl.BlockSpec(memory_space=pltpu.MemorySpace.SMEM),    # [0.5*s, 0.25*s]
            pl.BlockSpec((tile_rows, LANES), lambda i: (i, 0)),   # x tile
        ],
        out_specs=pl.BlockSpec((tile_rows, LANES), lambda i: (i, 0)),
        compiler_params=pltpu.CompilerParams(
            dimension_semantics=("parallel",),    # megacore sharding on v7x
            vmem_limit_bytes=VMEM_LIMIT_BYTES),
    )(scalars, x2d)


def logistic_density(x, s_param, s_min):
    """Elementwise logistic density. x: any-shape array. s_param/s_min: scalars."""
    orig_shape, orig_dtype = x.shape, x.dtype

    # Effective sharpness s = s_min + |s_param|  (cheap scalar glue in JAX).
    s = jnp.float32(s_min) + jnp.abs(jnp.asarray(s_param, jnp.float32))
    scalars = jnp.stack([0.5 * s, 0.25 * s]).astype(jnp.float32)

    itemsize = jnp.dtype(orig_dtype).itemsize
    if itemsize == 4:
        slab_dtype, sublane = orig_dtype, 8
    elif itemsize == 2:
        slab_dtype, sublane = orig_dtype, 16      # sub-32-bit sublane packing
    else:
        slab_dtype, sublane = jnp.float32, 8      # fallback: compute slab in f32

    flat = x.reshape(-1)
    if flat.dtype != slab_dtype:
        flat = flat.astype(slab_dtype)
    n = flat.shape[0]
    if n == 0:
        return jnp.zeros(orig_shape, orig_dtype)

    slab_itemsize = jnp.dtype(slab_dtype).itemsize
    bulk_rows = n // LANES
    tail_n = n - bulk_rows * LANES

    pieces = []
    if bulk_rows > 0:
        # Zero-copy reshape when n is lane-aligned (common case); otherwise only
        # the lane-aligned bulk prefix goes through the kernel.
        bulk = flat[: bulk_rows * LANES].reshape(bulk_rows, LANES)
        tile_rows = _choose_tile_rows(bulk_rows, slab_itemsize, sublane)
        pieces.append(_run_2d(bulk, scalars, tile_rows).reshape(-1))
    if tail_n > 0:
        # < 128 leftover elements: plain jnp; avoids padding/slicing the whole slab.
        t = jnp.tanh(scalars[0] * flat[bulk_rows * LANES:].astype(jnp.float32))
        pieces.append((scalars[1] * (1.0 - t * t)).astype(slab_dtype))

    out_flat = pieces[0] if len(pieces) == 1 else jnp.concatenate(pieces)
    return out_flat.reshape(orig_shape).astype(orig_dtype)


def _reference(x, s_param, s_min):
    # Naive PyTorch formula (exp form), for verification.
    s = jnp.float32(s_min) + jnp.abs(jnp.float32(s_param))
    e = jnp.exp(-s * x.astype(jnp.float32))
    return (s * e / (1.0 + e) ** 2).astype(x.dtype)


if __name__ == "__main__":
    key = jax.random.PRNGKey(0)
    S_INIT = 0.3     # opts.s_init
    S_MIN = 0.1      # opts.s_min

    # 1) Lane-aligned NCHW input (zero-copy reshape, single block).
    x = jax.random.normal(key, (2, 4, 16, 16), dtype=jnp.float32)
    out = jax.block_until_ready(logistic_density(x, S_INIT, S_MIN))
    ref = _reference(x, S_INIT, S_MIN)
    assert out.shape == x.shape and out.dtype == x.dtype
    assert jnp.allclose(out, ref, atol=1e-6, rtol=1e-5), "mismatch (aligned)"

    # 2) Ragged total size: lane-aligned bulk through the kernel + tiny jnp tail.
    k2, k3 = jax.random.split(key)
    x2 = jax.random.normal(k2, (2, 3, 17, 11), dtype=jnp.float32)
    out2 = jax.block_until_ready(logistic_density(x2, S_INIT, S_MIN))
    ref2 = _reference(x2, S_INIT, S_MIN)
    assert out2.shape == x2.shape and out2.dtype == x2.dtype
    assert jnp.allclose(out2, ref2, atol=1e-6, rtol=1e-5), "mismatch (ragged)"

    # 3) Multi-step grid with a masked (non-divisible) boundary block.
    x3 = jax.random.normal(k3, (2, 4, 128, 80), dtype=jnp.float32)
    out3 = jax.block_until_ready(logistic_density(x3, S_INIT, S_MIN))
    ref3 = _reference(x3, S_INIT, S_MIN)
    assert out3.shape == x3.shape and out3.dtype == x3.dtype
    assert jnp.allclose(out3, ref3, atol=1e-6, rtol=1e-5), "mismatch (multi-tile)"

    print("KERNEL_OK")
</pallas_src>

<mosaic_0001>
module attributes {stable_mosaic.version = 11 : i64} {
  func.func @_logistic_density_kernel(%arg0: i32, %arg1: memref<2xf32, #tpu.memory_space<smem>>, %arg2: memref<16x128xf32, #tpu.memory_space<vmem>>, %arg3: memref<16x128xf32, #tpu.memory_space<vmem>>) attributes {dimension_semantics = [#tpu.dimension_semantics<parallel>], iteration_bounds = array<i64: 1>, scalar_prefetch = 0 : i64, scratch_operands = 0 : i64, tpu.core_type = #tpu.core_type<tc>, window_params = [{transform_indices = @transform_0, window_bounds = array<i64: 2>}, {transform_indices = @transform_1, window_bounds = array<i64: 16, 128>}, {transform_indices = @transform_2, window_bounds = array<i64: 16, 128>}]} {
    %c0 = arith.constant 0 : index
    %0 = memref.load %arg1[%c0] : memref<2xf32, #tpu.memory_space<smem>>
    %c1 = arith.constant 1 : index
    %1 = memref.load %arg1[%c1] : memref<2xf32, #tpu.memory_space<smem>>
    %c0_0 = arith.constant 0 : index
    %c0_1 = arith.constant 0 : index
    %2 = vector.load %arg2[%c0_0, %c0_1] : memref<16x128xf32, #tpu.memory_space<vmem>>, vector<16x128xf32>
    %3 = vector.broadcast %0 : f32 to vector<16x128xf32>
    %4 = arith.mulf %3, %2 : vector<16x128xf32>
    %5 = math.tanh %4 : vector<16x128xf32>
    %6 = arith.mulf %5, %5 : vector<16x128xf32>
    %cst = arith.constant 1.000000e+00 : f32
    %7 = vector.broadcast %cst : f32 to vector<16x128xf32>
    %8 = arith.subf %7, %6 : vector<16x128xf32>
    %9 = vector.broadcast %1 : f32 to vector<16x128xf32>
    %10 = arith.mulf %9, %8 : vector<16x128xf32>
    %c0_2 = arith.constant 0 : index
    %c0_3 = arith.constant 0 : index
    %11 = vector.load %arg3[%c0_2, %c0_3] : memref<16x128xf32, #tpu.memory_space<vmem>>, vector<16x128xf32>
    tpu.vector_store %arg3[%c0_2, %c0_3], %10 {strides = array<i32>} : memref<16x128xf32, #tpu.memory_space<vmem>>, vector<16x128xf32>,
    return
  }
  func.func @transform_0(%arg0: i32) -> i32 {
    %c0_i32 = arith.constant 0 : i32
    %c0_i32_0 = arith.constant 0 : i32
    return %c0_i32 : i32
  }
  func.func @transform_1(%arg0: i32) -> (i32, i32) {
    %c0_i32 = arith.constant 0 : i32
    %c0_i32_0 = arith.constant 0 : i32
    return %arg0, %c0_i32 : i32, i32
  }
  func.func @transform_2(%arg0: i32) -> (i32, i32) {
    %c0_i32 = arith.constant 0 : i32
    %c0_i32_0 = arith.constant 0 : i32
    return %arg0, %c0_i32 : i32, i32
  }
}

</mosaic_0001>

<llo_original>
// kernel: tpu_custom_call.1
$region0: #{tpu_custom_call.1}
  #allocation0 [shape = 'u32[]', space=smem, size = 0x4, offset = 0x4, fixed_abs, tag = 'smem constant byte address 0x4 - core index']
  #allocation1 [shape = 'u32[144,128]{1,0:T(1,128)}', space=vmem, size = 0x12000, scoped, tag = 'internal scratch']
  %s0 = inlined_call_operand.hbm [shape: f32[2], index: 0, kind: input, shape index: {}]
  %s1 = inlined_call_operand.hbm [shape: f32[16,128], index: 1, kind: input, shape index: {}]
  %s2 = inlined_call_operand.hbm [shape: f32[16,128], index: 2, kind: output, shape index: {}]
  %s3 = sld [smem:[#allocation0]]
  $region26: #{tpu_custom_call.1} parent=0
    _
  %s5 = ssub.s32 1, %s3
  %s6 = scalar_select 0, %s5, %s3
  $region1: #{tpu_custom_call.1} parent=0
    #allocation2 [shape = 'u8[512]{0}', space=smem, size = 0x200, scoped, tag = 'input window, operand 0, single buffered']
    #allocation3 [shape = 's32[1]{0}', space=sflag, size = 0x4, scoped, tag = 'scoped memory for tpu_custom_call.1']
    #allocation4 [shape = 's32[1]{0}', space=sflag, size = 0x4, scoped, tag = 'scoped memory for tpu_custom_call.1']
    #allocation5 [shape = 's32[1]{0}', space=sflag, size = 0x4, scoped, tag = 'scoped memory for tpu_custom_call.1']
    #allocation6 [shape = 'u8[8192]{0}', space=vmem, size = 0x2000, scoped, tag = 'input window, operand 1, single buffered']
    #allocation7 [shape = 'u8[8192]{0}', space=vmem, size = 0x2000, scoped, tag = 'output window, operand 0, single buffered']
    %7 = vsyncpa [#allocation5], 0
    %8 = vsyncpa [#allocation3], 0
    %9 = vsyncpa [#allocation4], 0
    // Predicated region
    $region2: #{tpu_custom_call.1} parent=1 // pred_check
      _
    $region3: #{tpu_custom_call.1} parent=1 // pred_check_branch
      %11 = sbr.rel (0) target = $region5
    $region4: #{tpu_custom_call.1} parent=1 // pred_region
      %s13 = ssub.s32 16, 16
      %14 = vsyncadd [#allocation5], %s13
      %17 = dma.hbm_to_smem %s0, 16, [#allocation2], [#allocation5]
    $region5: #{tpu_custom_call.1} parent=1 // pred_fallthru
      _
    // Predicated region
    $region6: #{tpu_custom_call.1} parent=1 // pred_check
      _
    $region7: #{tpu_custom_call.1} parent=1 // pred_check_branch
      %19 = sbr.rel (0) target = $region9
    $region8: #{tpu_custom_call.1} parent=1 // pred_region
      %s21 = ssub.s32 256, 256
      %22 = vsyncadd [#allocation3], %s21
      %s23 = sshll.u32 [#allocation6], 4
      %s24 = int_to_ptr.vmem [resolvable:$true] %s23
      %29 = dma.hbm_to_vmem [thread:$0]  %s1, 256, %s24, [#allocation3], 128, 128, 8
    $region9: #{tpu_custom_call.1} parent=1 // pred_fallthru
      _
    // Predicated region
    $region10: #{tpu_custom_call.1} parent=1 // pred_check
      _
    $region11: #{tpu_custom_call.1} parent=1 // pred_check_branch
      %31 = sbr.rel (0) target = $region13
    $region12: #{tpu_custom_call.1} parent=1 // pred_region
      %32 = dma.done [#allocation5], 16
    $region13: #{tpu_custom_call.1} parent=1 // pred_fallthru
      _
    // Predicated region
    $region14: #{tpu_custom_call.1} parent=1 // pred_check
      _
    $region15: #{tpu_custom_call.1} parent=1 // pred_check_branch
      %34 = sbr.rel (0) target = $region17
    $region16: #{tpu_custom_call.1} parent=1 // pred_region
      %35 = dma.done [#allocation3], 256
    $region17: #{tpu_custom_call.1} parent=1 // pred_fallthru
      _
    %36 = sfence
    %s37 = sld [smem:[#allocation2]]
    %s38 = sld [smem:[#allocation2 + $0x1]]
    %v39 = vld [vmem:[#allocation6] sm:$0xff]
    %v40 = vld [vmem:[#allocation6 + $0x8] sm:$0xff]
    %v41 = vstv %s37
    %v42 = vmul.f32 %v41, %v39
    %v43 = vmul.f32 %v41, %v40
    %v44 = vtanh.pop %v42
    %v45 = vtanh.pop %v43
    %v46 = vmul.f32 %v44, %v44
    %v47 = vmul.f32 %v45, %v45
    %v48 = vsub.f32 1.0, %v46
    %v49 = vsub.f32 1.0, %v47
    %v50 = vstv %s38
    %v51 = vmul.f32 %v50, %v48
    %v52 = vmul.f32 %v50, %v49
    %53 = vst [vmem:[#allocation7] sm:$0xff] %v51
    %54 = vst [vmem:[#allocation7 + $0x8] sm:$0xff] %v52
    // Predicated region
    $region18: #{tpu_custom_call.1} parent=1 // pred_check
      _
    $region19: #{tpu_custom_call.1} parent=1 // pred_check_branch
      %56 = sbr.rel (0) target = $region21
    $region20: #{tpu_custom_call.1} parent=1 // pred_region
      %s58 = ssub.s32 256, 256
      %59 = vsyncadd [#allocation4], %s58
      %s60 = sshll.u32 [#allocation7], 4
      %s61 = int_to_ptr.vmem [resolvable:$true] %s60
      %66 = dma.vmem_to_hbm [thread:$0]  %s61, 256, %s2, [#allocation4], 128, 128, 8
    $region21: #{tpu_custom_call.1} parent=1 // pred_fallthru
      _
    // Predicated region
    $region22: #{tpu_custom_call.1} parent=1 // pred_check
      _
    $region23: #{tpu_custom_call.1} parent=1 // pred_check_branch
      %68 = sbr.rel (0) target = $region25
    $region24: #{tpu_custom_call.1} parent=1 // pred_region
      %69 = dma.done [#allocation4], 256
    $region25: #{tpu_custom_call.1} parent=1 // pred_fallthru
      _
    %70 = vsyncpa [#allocation3], 1
    %71 = vsyncpa [#allocation4], 1
    %72 = vsyncpa [#allocation5], 1

</llo_original>
